<compile_context>
chip_gen: v6e
topology: v6e:2x2x1
jax: 0.10.0
libtpu: 0.0.40
codegen_flags: <defaults>
</compile_context>

<pallas_src>
import jax
import jax.numpy as jnp
from jax.experimental import pallas as pl
from jax.experimental.pallas import tpu as pltpu

D = 512  # hidden size fixed by the module's assert W.shape == (512, 512)


def _round_up(x: int, m: int) -> int:
    return ((x + m - 1) // m) * m


def _choose_block_rows(n_rows: int) -> int:
    """Large tiles (best HBM-roofline fraction) but keep >=2 grid steps when
    N allows so the 'parallel' grid axis can shard across v7x's two TCs."""
    if n_rows <= 512:
        return _round_up(max(n_rows, 8), 8)
    return min(1024, _round_up((n_rows + 1) // 2, 256))


def _align_kernel(x_ref, wt_ref, o_ref):
    """L2-normalize rows of x (f32 math), then x_n @ W^T via pre-transposed W."""
    xf = x_ref[...].astype(jnp.float32)                      # (TM, D) f32 norm math
    sq = jnp.sum(xf * xf, axis=-1, keepdims=True)            # (TM, 1)
    xn = xf * jax.lax.rsqrt(sq)                              # (TM, D)
    lhs = xn.astype(wt_ref.dtype)                            # cast LHS only (no-op if f32)
    out = jnp.dot(lhs, wt_ref[...],                          # (TM, D) @ (D, D) on MXU
                  preferred_element_type=jnp.float32)
    o_ref[...] = out.astype(o_ref.dtype)


def _normalize_kernel(x_ref, o_ref):
    """W is None path: just L2-normalize rows."""
    xf = x_ref[...].astype(jnp.float32)
    sq = jnp.sum(xf * xf, axis=-1, keepdims=True)
    o_ref[...] = (xf * jax.lax.rsqrt(sq)).astype(o_ref.dtype)


def align_embeddings(embeds: jax.Array, W=None, *, block_rows=None, mxu_dtype=None):
    """Pallas wrapper.  `mxu_dtype=jnp.bfloat16` feeds bf16 operands to the MXU
    (f32 accumulation) for v6e/v7x throughput; default keeps exact f32 semantics."""
    N, Din = embeds.shape
    assert Din == D, f"embeds hidden dim must be {D}, got {Din}"

    tm = block_rows if block_rows is not None else _choose_block_rows(N)
    tm = _round_up(tm, 8)

    grid = (pl.cdiv(N, tm),)   # remainder tile masked by Pallas; no host-side padding
    compiler_params = pltpu.CompilerParams(
        dimension_semantics=("parallel",),
        vmem_limit_bytes=32 * 1024 * 1024,  # ~11 MiB used at TM=1024 f32; safe on v5e/v6e/v7x
    )

    if W is None:
        return pl.pallas_call(
            _normalize_kernel,
            out_shape=jax.ShapeDtypeStruct((N, D), embeds.dtype),
            grid_spec=pltpu.PrefetchScalarGridSpec(
                num_scalar_prefetch=0,
                grid=grid,
                in_specs=[pl.BlockSpec((tm, D), lambda i: (i, 0))],
                out_specs=pl.BlockSpec((tm, D), lambda i: (i, 0)),
            ),
            compiler_params=compiler_params,
        )(embeds)

    assert W.shape == (D, D), f"W.shape = {W.shape}"
    wt = W.T                                   # one-time host-side transpose -> (K, N_out)
    if mxu_dtype is not None:
        wt = wt.astype(mxu_dtype)              # weight cast once, not per grid step

    in_b = jnp.dtype(embeds.dtype).itemsize
    w_b = jnp.dtype(wt.dtype).itemsize
    out_b = jnp.dtype(embeds.dtype).itemsize
    cost = pl.CostEstimate(
        flops=2 * N * D * D,
        transcendentals=N,                     # one rsqrt per row
        bytes_accessed=N * D * (in_b + out_b) + D * D * w_b,
    )

    return pl.pallas_call(
        _align_kernel,
        out_shape=jax.ShapeDtypeStruct((N, D), embeds.dtype),
        grid_spec=pltpu.PrefetchScalarGridSpec(
            num_scalar_prefetch=0,
            grid=grid,
            in_specs=[
                pl.BlockSpec((tm, D), lambda i: (i, 0)),   # embeds row tile
                pl.BlockSpec((D, D), lambda i: (0, 0)),    # full W^T, resident in VMEM
            ],
            out_specs=pl.BlockSpec((tm, D), lambda i: (i, 0)),
        ),
        compiler_params=compiler_params,
        cost_estimate=cost,
    )(embeds, wt)


# TODO(synk): `forward` / `pool_hidden_state` are abstract (`pass`) in the parent
# class, and the wandb seed / W_layer_gap config assertions have no runtime
# equivalent here.


if __name__ == "__main__":
    key = jax.random.PRNGKey(0)
    k_e, k_w, k_e2 = jax.random.split(key, 3)

    # --- primary check: small batch, exact f32 semantics --------------------
    N = 8
    embeds = jax.random.normal(k_e, (N, D), dtype=jnp.float32)
    W = jax.random.normal(k_w, (D, D), dtype=jnp.float32) * 0.02  # setW(W)

    out = jax.block_until_ready(align_embeddings(embeds, W))
    ref_n = embeds / jnp.linalg.norm(embeds, axis=-1, keepdims=True)
    ref = ref_n @ W.T
    assert out.shape == (N, D)
    assert jnp.allclose(out, ref, atol=1e-4, rtol=1e-4), "f32 mismatch vs reference"

    # --- ragged / masked-remainder / bf16-MXU path (v6e/v7x fast path) ------
    N2 = 300  # not a multiple of 8 -> exercises remainder-block masking
    e2 = jax.random.normal(k_e2, (N2, D), dtype=jnp.float32)
    out2 = jax.block_until_ready(align_embeddings(e2, W, mxu_dtype=jnp.bfloat16))
    ref2 = (e2 / jnp.linalg.norm(e2, axis=-1, keepdims=True)) @ W.T
    assert out2.shape == (N2, D)
    assert jnp.allclose(out2, ref2, atol=1e-2, rtol=1e-2), "bf16-MXU mismatch vs reference"

    # --- multi-tile f32 path (forces >1 grid step) ---------------------------
    out2b = jax.block_until_ready(align_embeddings(e2, W, block_rows=128))
    assert jnp.allclose(out2b, ref2, atol=1e-4, rtol=1e-4), "multi-tile mismatch"

    # --- W is None path: normalized embeddings returned as-is ---------------
    out3 = jax.block_until_ready(align_embeddings(e2, None))
    ref3 = e2 / jnp.linalg.norm(e2, axis=-1, keepdims=True)
    assert jnp.allclose(out3, ref3, atol=1e-5, rtol=1e-5), "normalize-only mismatch"

    print("KERNEL_OK")
</pallas_src>

<mosaic_0001>
module attributes {stable_mosaic.version = 11 : i64} {
  func.func @_align_kernel(%arg0: i32, %arg1: memref<8x512xf32, #tpu.memory_space<vmem>>, %arg2: memref<512x512xf32, #tpu.memory_space<vmem>>, %arg3: memref<8x512xf32, #tpu.memory_space<vmem>>) attributes {dimension_semantics = [#tpu.dimension_semantics<parallel>], iteration_bounds = array<i64: 1>, scalar_prefetch = 0 : i64, scratch_operands = 0 : i64, tpu.core_type = #tpu.core_type<tc>, window_params = [{transform_indices = @transform_0, window_bounds = array<i64: 8, 512>}, {pipeline_mode = #tpu.pipeline_mode<synchronous>, transform_indices = @transform_1, window_bounds = array<i64: 512, 512>}, {transform_indices = @transform_2, window_bounds = array<i64: 8, 512>}]} {
    %c0 = arith.constant 0 : index
    %c0_0 = arith.constant 0 : index
    %0 = vector.load %arg1[%c0, %c0_0] : memref<8x512xf32, #tpu.memory_space<vmem>>, vector<8x512xf32>
    %1 = arith.mulf %0, %0 : vector<8x512xf32>
    %cst = arith.constant dense<0.000000e+00> : vector<8xf32>
    %2 = vector.multi_reduction <add>, %1, %cst [1] : vector<8x512xf32> to vector<8xf32>
    %3 = vector.shape_cast %2 : vector<8xf32> to vector<8x1xf32>
    %4 = math.rsqrt %3 : vector<8x1xf32>
    %5 = vector.broadcast %4 : vector<8x1xf32> to vector<8x512xf32>
    %6 = arith.mulf %0, %5 : vector<8x512xf32>
    %c0_1 = arith.constant 0 : index
    %c0_2 = arith.constant 0 : index
    %7 = vector.load %arg2[%c0_1, %c0_2] : memref<512x512xf32, #tpu.memory_space<vmem>>, vector<512x512xf32>
    %cst_3 = arith.constant dense<0.000000e+00> : vector<8x512xf32>
    %8 = tpu.matmul %6, %7, %cst_3 {dimension_numbers = #tpu.dot_dimension_numbers<[1], [0], [0], [1], [0, 0, 1, 1], [], []>} : vector<8x512xf32>, vector<512x512xf32>, vector<8x512xf32> -> vector<8x512xf32>
    %c0_4 = arith.constant 0 : index
    %c0_5 = arith.constant 0 : index
    %9 = vector.load %arg3[%c0_4, %c0_5] : memref<8x512xf32, #tpu.memory_space<vmem>>, vector<8x512xf32>
    tpu.vector_store %arg3[%c0_4, %c0_5], %8 {strides = array<i32>} : memref<8x512xf32, #tpu.memory_space<vmem>>, vector<8x512xf32>,
    return
  }
  func.func @transform_0(%arg0: i32) -> (i32, i32) {
    %c0_i32 = arith.constant 0 : i32
    %c0_i32_0 = arith.constant 0 : i32
    return %arg0, %c0_i32 : i32, i32
  }
  func.func @transform_1(%arg0: i32) -> (i32, i32) {
    %c0_i32 = arith.constant 0 : i32
    %c0_i32_0 = arith.constant 0 : i32
    %c0_i32_1 = arith.constant 0 : i32
    return %c0_i32, %c0_i32_0 : i32, i32
  }
  func.func @transform_2(%arg0: i32) -> (i32, i32) {
    %c0_i32 = arith.constant 0 : i32
    %c0_i32_0 = arith.constant 0 : i32
    return %arg0, %c0_i32 : i32, i32
  }
}

</mosaic_0001>

<llo_original>
// kernel: tpu_custom_call.1
$region0: #{tpu_custom_call.1}
  #allocation0 [shape = 'u32[]', space=smem, size = 0x4, offset = 0x4, fixed_abs, tag = 'smem constant byte address 0x4 - core index']
  #allocation1 [shape = 'u32[144,128]{1,0:T(1,128)}', space=vmem, size = 0x12000, scoped, tag = 'internal scratch']
  %s0 = inlined_call_operand.hbm [shape: f32[8,512], index: 0, kind: input, shape index: {}]
  %s1 = inlined_call_operand.hbm [shape: f32[512,512], index: 1, kind: input, shape index: {}]
  %s2 = inlined_call_operand.hbm [shape: f32[8,512], index: 2, kind: output, shape index: {}]
  %s3 = sld [smem:[#allocation0]]
  $region26: #{tpu_custom_call.1} parent=0
    _
  %s5 = ssub.s32 1, %s3
  %s6 = scalar_select 0, %s5, %s3
  $region1: #{tpu_custom_call.1} parent=0
    #allocation2 [shape = 'u8[16384]{0}', space=vmem, size = 0x4000, scoped, tag = 'input window, operand 0, single buffered']
    #allocation3 [shape = 's32[1]{0}', space=sflag, size = 0x4, scoped, tag = 'scoped memory for tpu_custom_call.1']
    #allocation4 [shape = 's32[1]{0}', space=sflag, size = 0x4, scoped, tag = 'scoped memory for tpu_custom_call.1']
    #allocation5 [shape = 'u8[1048576]{0}', space=vmem, size = 0x100000, scoped, tag = 'input window, operand 1, single buffered']
    #allocation6 [shape = 's32[1]{0}', space=sflag, size = 0x4, scoped, tag = 'scoped memory for tpu_custom_call.1']
    #allocation7 [shape = 'u8[16384]{0}', space=vmem, size = 0x4000, scoped, tag = 'output window, operand 0, single buffered']
    %7 = vsyncpa [#allocation3], 0
    %8 = vsyncpa [#allocation6], 0
    %9 = vsyncpa [#allocation4], 0
    // Predicated region
    $region2: #{tpu_custom_call.1} parent=1 // pred_check
      _
    $region3: #{tpu_custom_call.1} parent=1 // pred_check_branch
      %11 = sbr.rel (0) target = $region5
    $region4: #{tpu_custom_call.1} parent=1 // pred_region
      %s13 = ssub.s32 512, 512
      %14 = vsyncadd [#allocation3], %s13
      %s16 = sshll.u32 [#allocation2], 4
      %s17 = int_to_ptr.vmem [resolvable:$true] %s16
      %19 = dma.hbm_to_vmem [thread:$0]  %s0, 512, %s17, [#allocation3]
    $region5: #{tpu_custom_call.1} parent=1 // pred_fallthru
      _
    // Predicated region
    $region6: #{tpu_custom_call.1} parent=1 // pred_check
      _
    $region7: #{tpu_custom_call.1} parent=1 // pred_check_branch
      %21 = sbr.rel (0) target = $region9
    $region8: #{tpu_custom_call.1} parent=1 // pred_region
      %s23 = ssub.s32 32768, 32768
      %24 = vsyncadd [#allocation6], %s23
      %s25 = sshll.u32 [#allocation5], 4
      %s26 = int_to_ptr.vmem [resolvable:$true] %s25
      %31 = dma.hbm_to_vmem [thread:$0]  %s1, 32768, %s26, [#allocation6], 512, 512, 32
    $region9: #{tpu_custom_call.1} parent=1 // pred_fallthru
      _
    // Predicated region
    $region10: #{tpu_custom_call.1} parent=1 // pred_check
      _
    $region11: #{tpu_custom_call.1} parent=1 // pred_check_branch
      %33 = sbr.rel (0) target = $region13
    $region12: #{tpu_custom_call.1} parent=1 // pred_region
      %34 = dma.done [#allocation3], 512
    $region13: #{tpu_custom_call.1} parent=1 // pred_fallthru
      _
    // Predicated region
    $region14: #{tpu_custom_call.1} parent=1 // pred_check
      _
    $region15: #{tpu_custom_call.1} parent=1 // pred_check_branch
      %36 = sbr.rel (0) target = $region17
    $region16: #{tpu_custom_call.1} parent=1 // pred_region
      %37 = dma.done [#allocation6], 32768
    $region17: #{tpu_custom_call.1} parent=1 // pred_fallthru
      _
    %v38 = vld [vmem:[#allocation2] sm:$0xff]
    %v39 = vld [vmem:[#allocation2 + $0x8] sm:$0xff]
    %v40 = vld [vmem:[#allocation2 + $0x10] sm:$0xff]
    %v41 = vld [vmem:[#allocation2 + $0x18] sm:$0xff]
    %v42 = vmul.f32 %v38, %v38
    %v43 = vmul.f32 %v39, %v39
    %v44 = vmul.f32 %v40, %v40
    %v45 = vmul.f32 %v41, %v41
    %v46 = vadd.f32 %v42, %v43
    %v47 = vadd.f32 %v46, %v44
    %v48 = vadd.f32 %v47, %v45
    %49 = vadd.xlane.f32.xlu0 %v48
    %v50 = vpop.xlane.xlu0 %49
    %v51 = vrsqrt.pop %v50
    %v52 = vmul.f32 %v38, %v51
    %v53 = vmul.f32 %v39, %v51
    %v54 = vmul.f32 %v40, %v51
    %v55 = vmul.f32 %v41, %v51
    %v56 = vld [vmem:[#allocation5] sm:$0xff]
    %v57 = vld [vmem:[#allocation5 + $0x8] sm:$0xff]
    %v58 = vld [vmem:[#allocation5 + $0x10] sm:$0xff]
    %v59 = vld [vmem:[#allocation5 + $0x18] sm:$0xff]
    %v60 = vld [vmem:[#allocation5 + $0x20] sm:$0xff]
    %v61 = vld [vmem:[#allocation5 + $0x28] sm:$0xff]
    %v62 = vld [vmem:[#allocation5 + $0x30] sm:$0xff]
    %v63 = vld [vmem:[#allocation5 + $0x38] sm:$0xff]
    %v64 = vld [vmem:[#allocation5 + $0x40] sm:$0xff]
    %v65 = vld [vmem:[#allocation5 + $0x48] sm:$0xff]
    %v66 = vld [vmem:[#allocation5 + $0x50] sm:$0xff]
    %v67 = vld [vmem:[#allocation5 + $0x58] sm:$0xff]
    %v68 = vld [vmem:[#allocation5 + $0x60] sm:$0xff]
    %v69 = vld [vmem:[#allocation5 + $0x68] sm:$0xff]
    %v70 = vld [vmem:[#allocation5 + $0x70] sm:$0xff]
    %v71 = vld [vmem:[#allocation5 + $0x78] sm:$0xff]
    %v72 = vld [vmem:[#allocation5 + $0x80] sm:$0xff]
    %v73 = vld [vmem:[#allocation5 + $0x88] sm:$0xff]
    %v74 = vld [vmem:[#allocation5 + $0x90] sm:$0xff]
    %v75 = vld [vmem:[#allocation5 + $0x98] sm:$0xff]
    %v76 = vld [vmem:[#allocation5 + $0xa0] sm:$0xff]
    %v77 = vld [vmem:[#allocation5 + $0xa8] sm:$0xff]
    %v78 = vld [vmem:[#allocation5 + $0xb0] sm:$0xff]
    %v79 = vld [vmem:[#allocation5 + $0xb8] sm:$0xff]
    %v80 = vld [vmem:[#allocation5 + $0xc0] sm:$0xff]
    %v81 = vld [vmem:[#allocation5 + $0xc8] sm:$0xff]
    %v82 = vld [vmem:[#allocation5 + $0xd0] sm:$0xff]
    %v83 = vld [vmem:[#allocation5 + $0xd8] sm:$0xff]
    %v84 = vld [vmem:[#allocation5 + $0xe0] sm:$0xff]
    %v85 = vld [vmem:[#allocation5 + $0xe8] sm:$0xff]
    %v86 = vld [vmem:[#allocation5 + $0xf0] sm:$0xff]
    %v87 = vld [vmem:[#allocation5 + $0xf8] sm:$0xff]
    %v88 = vld [vmem:[#allocation5 + $0x100] sm:$0xff]
    %v89 = vld [vmem:[#allocation5 + $0x108] sm:$0xff]
    %v90 = vld [vmem:[#allocation5 + $0x110] sm:$0xff]
    %v91 = vld [vmem:[#allocation5 + $0x118] sm:$0xff]
    %v92 = vld [vmem:[#allocation5 + $0x120] sm:$0xff]
    %v93 = vld [vmem:[#allocation5 + $0x128] sm:$0xff]
    %v94 = vld [vmem:[#allocation5 + $0x130] sm:$0xff]
    %v95 = vld [vmem:[#allocation5 + $0x138] sm:$0xff]
    %v96 = vld [vmem:[#allocation5 + $0x140] sm:$0xff]
    %v97 = vld [vmem:[#allocation5 + $0x148] sm:$0xff]
    %v98 = vld [vmem:[#allocation5 + $0x150] sm:$0xff]
    %v99 = vld [vmem:[#allocation5 + $0x158] sm:$0xff]
    %v100 = vld [vmem:[#allocation5 + $0x160] sm:$0xff]
    %v101 = vld [vmem:[#allocation5 + $0x168] sm:$0xff]
    %v102 = vld [vmem:[#allocation5 + $0x170] sm:$0xff]
    %v103 = vld [vmem:[#allocation5 + $0x178] sm:$0xff]
    %v104 = vld [vmem:[#allocation5 + $0x180] sm:$0xff]
    %v105 = vld [vmem:[#allocation5 + $0x188] sm:$0xff]
    %v106 = vld [vmem:[#allocation5 + $0x190] sm:$0xff]
    %v107 = vld [vmem:[#allocation5 + $0x198] sm:$0xff]
    %v108 = vld [vmem:[#allocation5 + $0x1a0] sm:$0xff]
    %v109 = vld [vmem:[#allocation5 + $0x1a8] sm:$0xff]
    %v110 = vld [vmem:[#allocation5 + $0x1b0] sm:$0xff]
    %v111 = vld [vmem:[#allocation5 + $0x1b8] sm:$0xff]
    %v112 = vld [vmem:[#allocation5 + $0x1c0] sm:$0xff]
    %v113 = vld [vmem:[#allocation5 + $0x1c8] sm:$0xff]
    %v114 = vld [vmem:[#allocation5 + $0x1d0] sm:$0xff]
    %v115 = vld [vmem:[#allocation5 + $0x1d8] sm:$0xff]
    %v116 = vld [vmem:[#allocation5 + $0x1e0] sm:$0xff]
    %v117 = vld [vmem:[#allocation5 + $0x1e8] sm:$0xff]
    %v118 = vld [vmem:[#allocation5 + $0x1f0] sm:$0xff]
    %v119 = vld [vmem:[#allocation5 + $0x1f8] sm:$0xff]
    %v120 = vld [vmem:[#allocation5 + $0x200] sm:$0xff]
    %v121 = vld [vmem:[#allocation5 + $0x208] sm:$0xff]
    %v122 = vld [vmem:[#allocation5 + $0x210] sm:$0xff]
    %v123 = vld [vmem:[#allocation5 + $0x218] sm:$0xff]
    %v124 = vld [vmem:[#allocation5 + $0x220] sm:$0xff]
    %v125 = vld [vmem:[#allocation5 + $0x228] sm:$0xff]
    %v126 = vld [vmem:[#allocation5 + $0x230] sm:$0xff]
    %v127 = vld [vmem:[#allocation5 + $0x238] sm:$0xff]
    %v128 = vld [vmem:[#allocation5 + $0x240] sm:$0xff]
    %v129 = vld [vmem:[#allocation5 + $0x248] sm:$0xff]
    %v130 = vld [vmem:[#allocation5 + $0x250] sm:$0xff]
    %v131 = vld [vmem:[#allocation5 + $0x258] sm:$0xff]
    %v132 = vld [vmem:[#allocation5 + $0x260] sm:$0xff]
    %v133 = vld [vmem:[#allocation5 + $0x268] sm:$0xff]
    %v134 = vld [vmem:[#allocation5 + $0x270] sm:$0xff]
    %v135 = vld [vmem:[#allocation5 + $0x278] sm:$0xff]
    %v136 = vld [vmem:[#allocation5 + $0x280] sm:$0xff]
    %v137 = vld [vmem:[#allocation5 + $0x288] sm:$0xff]
    %v138 = vld [vmem:[#allocation5 + $0x290] sm:$0xff]
    %v139 = vld [vmem:[#allocation5 + $0x298] sm:$0xff]
    %v140 = vld [vmem:[#allocation5 + $0x2a0] sm:$0xff]
    %v141 = vld [vmem:[#allocation5 + $0x2a8] sm:$0xff]
    %v142 = vld [vmem:[#allocation5 + $0x2b0] sm:$0xff]
    %v143 = vld [vmem:[#allocation5 + $0x2b8] sm:$0xff]
    %v144 = vld [vmem:[#allocation5 + $0x2c0] sm:$0xff]
    %v145 = vld [vmem:[#allocation5 + $0x2c8] sm:$0xff]
    %v146 = vld [vmem:[#allocation5 + $0x2d0] sm:$0xff]
    %v147 = vld [vmem:[#allocation5 + $0x2d8] sm:$0xff]
    %v148 = vld [vmem:[#allocation5 + $0x2e0] sm:$0xff]
    %v149 = vld [vmem:[#allocation5 + $0x2e8] sm:$0xff]
    %v150 = vld [vmem:[#allocation5 + $0x2f0] sm:$0xff]
    %v151 = vld [vmem:[#allocation5 + $0x2f8] sm:$0xff]
    %v152 = vld [vmem:[#allocation5 + $0x300] sm:$0xff]
    %v153 = vld [vmem:[#allocation5 + $0x308] sm:$0xff]
    %v154 = vld [vmem:[#allocation5 + $0x310] sm:$0xff]
    %v155 = vld [vmem:[#allocation5 + $0x318] sm:$0xff]
    %v156 = vld [vmem:[#allocation5 + $0x320] sm:$0xff]
    %v157 = vld [vmem:[#allocation5 + $0x328] sm:$0xff]
    %v158 = vld [vmem:[#allocation5 + $0x330] sm:$0xff]
    %v159 = vld [vmem:[#allocation5 + $0x338] sm:$0xff]
    %v160 = vld [vmem:[#allocation5 + $0x340] sm:$0xff]
    %v161 = vld [vmem:[#allocation5 + $0x348] sm:$0xff]
    %v162 = vld [vmem:[#allocation5 + $0x350] sm:$0xff]
    %v163 = vld [vmem:[#allocation5 + $0x358] sm:$0xff]
    %v164 = vld [vmem:[#allocation5 + $0x360] sm:$0xff]
    %v165 = vld [vmem:[#allocation5 + $0x368] sm:$0xff]
    %v166 = vld [vmem:[#allocation5 + $0x370] sm:$0xff]
    %v167 = vld [vmem:[#allocation5 + $0x378] sm:$0xff]
    %v168 = vld [vmem:[#allocation5 + $0x380] sm:$0xff]
    %v169 = vld [vmem:[#allocation5 + $0x388] sm:$0xff]
    %v170 = vld [vmem:[#allocation5 + $0x390] sm:$0xff]
    %v171 = vld [vmem:[#allocation5 + $0x398] sm:$0xff]
    %v172 = vld [vmem:[#allocation5 + $0x3a0] sm:$0xff]
    %v173 = vld [vmem:[#allocation5 + $0x3a8] sm:$0xff]
    %v174 = vld [vmem:[#allocation5 + $0x3b0] sm:$0xff]
    %v175 = vld [vmem:[#allocation5 + $0x3b8] sm:$0xff]
    %v176 = vld [vmem:[#allocation5 + $0x3c0] sm:$0xff]
    %v177 = vld [vmem:[#allocation5 + $0x3c8] sm:$0xff]
    %v178 = vld [vmem:[#allocation5 + $0x3d0] sm:$0xff]
    %v179 = vld [vmem:[#allocation5 + $0x3d8] sm:$0xff]
    %v180 = vld [vmem:[#allocation5 + $0x3e0] sm:$0xff]
    %v181 = vld [vmem:[#allocation5 + $0x3e8] sm:$0xff]
    %v182 = vld [vmem:[#allocation5 + $0x3f0] sm:$0xff]
    %v183 = vld [vmem:[#allocation5 + $0x3f8] sm:$0xff]
    %v184 = vld [vmem:[#allocation5 + $0x400] sm:$0xff]
    %v185 = vld [vmem:[#allocation5 + $0x408] sm:$0xff]
    %v186 = vld [vmem:[#allocation5 + $0x410] sm:$0xff]
    %v187 = vld [vmem:[#allocation5 + $0x418] sm:$0xff]
    %v188 = vld [vmem:[#allocation5 + $0x420] sm:$0xff]
    %v189 = vld [vmem:[#allocation5 + $0x428] sm:$0xff]
    %v190 = vld [vmem:[#allocation5 + $0x430] sm:$0xff]
    %v191 = vld [vmem:[#allocation5 + $0x438] sm:$0xff]
    %v192 = vld [vmem:[#allocation5 + $0x440] sm:$0xff]
    %v193 = vld [vmem:[#allocation5 + $0x448] sm:$0xff]
    %v194 = vld [vmem:[#allocation5 + $0x450] sm:$0xff]
    %v195 = vld [vmem:[#allocation5 + $0x458] sm:$0xff]
    %v196 = vld [vmem:[#allocation5 + $0x460] sm:$0xff]
    %v197 = vld [vmem:[#allocation5 + $0x468] sm:$0xff]
    %v198 = vld [vmem:[#allocation5 + $0x470] sm:$0xff]
    %v199 = vld [vmem:[#allocation5 + $0x478] sm:$0xff]
    %v200 = vld [vmem:[#allocation5 + $0x480] sm:$0xff]
    %v201 = vld [vmem:[#allocation5 + $0x488] sm:$0xff]
    %v202 = vld [vmem:[#allocation5 + $0x490] sm:$0xff]
    %v203 = vld [vmem:[#allocation5 + $0x498] sm:$0xff]
    %v204 = vld [vmem:[#allocation5 + $0x4a0] sm:$0xff]
    %v205 = vld [vmem:[#allocation5 + $0x4a8] sm:$0xff]
    %v206 = vld [vmem:[#allocation5 + $0x4b0] sm:$0xff]
    %v207 = vld [vmem:[#allocation5 + $0x4b8] sm:$0xff]
    %v208 = vld [vmem:[#allocation5 + $0x4c0] sm:$0xff]
    %v209 = vld [vmem:[#allocation5 + $0x4c8] sm:$0xff]
    %v210 = vld [vmem:[#allocation5 + $0x4d0] sm:$0xff]
    %v211 = vld [vmem:[#allocation5 + $0x4d8] sm:$0xff]
    %v212 = vld [vmem:[#allocation5 + $0x4e0] sm:$0xff]
    %v213 = vld [vmem:[#allocation5 + $0x4e8] sm:$0xff]
    %v214 = vld [vmem:[#allocation5 + $0x4f0] sm:$0xff]
    %v215 = vld [vmem:[#allocation5 + $0x4f8] sm:$0xff]
    %v216 = vld [vmem:[#allocation5 + $0x500] sm:$0xff]
    %v217 = vld [vmem:[#allocation5 + $0x508] sm:$0xff]
    %v218 = vld [vmem:[#allocation5 + $0x510] sm:$0xff]
    %v219 = vld [vmem:[#allocation5 + $0x518] sm:$0xff]
    %v220 = vld [vmem:[#allocation5 + $0x520] sm:$0xff]
    %v221 = vld [vmem:[#allocation5 + $0x528] sm:$0xff]
    %v222 = vld [vmem:[#allocation5 + $0x530] sm:$0xff]
    %v223 = vld [vmem:[#allocation5 + $0x538] sm:$0xff]
    %v224 = vld [vmem:[#allocation5 + $0x540] sm:$0xff]
    %v225 = vld [vmem:[#allocation5 + $0x548] sm:$0xff]
    %v226 = vld [vmem:[#allocation5 + $0x550] sm:$0xff]
    %v227 = vld [vmem:[#allocation5 + $0x558] sm:$0xff]
    %v228 = vld [vmem:[#allocation5 + $0x560] sm:$0xff]
    %v229 = vld [vmem:[#allocation5 + $0x568] sm:$0xff]
    %v230 = vld [vmem:[#allocation5 + $0x570] sm:$0xff]
    %v231 = vld [vmem:[#allocation5 + $0x578] sm:$0xff]
    %v232 = vld [vmem:[#allocation5 + $0x580] sm:$0xff]
    %v233 = vld [vmem:[#allocation5 + $0x588] sm:$0xff]
    %v234 = vld [vmem:[#allocation5 + $0x590] sm:$0xff]
    %v235 = vld [vmem:[#allocation5 + $0x598] sm:$0xff]
    %v236 = vld [vmem:[#allocation5 + $0x5a0] sm:$0xff]
    %v237 = vld [vmem:[#allocation5 + $0x5a8] sm:$0xff]
    %v238 = vld [vmem:[#allocation5 + $0x5b0] sm:$0xff]
    %v239 = vld [vmem:[#allocation5 + $0x5b8] sm:$0xff]
    %v240 = vld [vmem:[#allocation5 + $0x5c0] sm:$0xff]
    %v241 = vld [vmem:[#allocation5 + $0x5c8] sm:$0xff]
    %v242 = vld [vmem:[#allocation5 + $0x5d0] sm:$0xff]
    %v243 = vld [vmem:[#allocation5 + $0x5d8] sm:$0xff]
    %v244 = vld [vmem:[#allocation5 + $0x5e0] sm:$0xff]
    %v245 = vld [vmem:[#allocation5 + $0x5e8] sm:$0xff]
    %v246 = vld [vmem:[#allocation5 + $0x5f0] sm:$0xff]
    %v247 = vld [vmem:[#allocation5 + $0x5f8] sm:$0xff]
    %v248 = vld [vmem:[#allocation5 + $0x600] sm:$0xff]
    %v249 = vld [vmem:[#allocation5 + $0x608] sm:$0xff]
    %v250 = vld [vmem:[#allocation5 + $0x610] sm:$0xff]
    %v251 = vld [vmem:[#allocation5 + $0x618] sm:$0xff]
    %v252 = vld [vmem:[#allocation5 + $0x620] sm:$0xff]
    %v253 = vld [vmem:[#allocation5 + $0x628] sm:$0xff]
    %v254 = vld [vmem:[#allocation5 + $0x630] sm:$0xff]
    %v255 = vld [vmem:[#allocation5 + $0x638] sm:$0xff]
    %v256 = vld [vmem:[#allocation5 + $0x640] sm:$0xff]
    %v257 = vld [vmem:[#allocation5 + $0x648] sm:$0xff]
    %v258 = vld [vmem:[#allocation5 + $0x650] sm:$0xff]
    %v259 = vld [vmem:[#allocation5 + $0x658] sm:$0xff]
    %v260 = vld [vmem:[#allocation5 + $0x660] sm:$0xff]
    %v261 = vld [vmem:[#allocation5 + $0x668] sm:$0xff]
    %v262 = vld [vmem:[#allocation5 + $0x670] sm:$0xff]
    %v263 = vld [vmem:[#allocation5 + $0x678] sm:$0xff]
    %v264 = vld [vmem:[#allocation5 + $0x680] sm:$0xff]
    %v265 = vld [vmem:[#allocation5 + $0x688] sm:$0xff]
    %v266 = vld [vmem:[#allocation5 + $0x690] sm:$0xff]
    %v267 = vld [vmem:[#allocation5 + $0x698] sm:$0xff]
    %v268 = vld [vmem:[#allocation5 + $0x6a0] sm:$0xff]
    %v269 = vld [vmem:[#allocation5 + $0x6a8] sm:$0xff]
    %v270 = vld [vmem:[#allocation5 + $0x6b0] sm:$0xff]
    %v271 = vld [vmem:[#allocation5 + $0x6b8] sm:$0xff]
    %v272 = vld [vmem:[#allocation5 + $0x6c0] sm:$0xff]
    %v273 = vld [vmem:[#allocation5 + $0x6c8] sm:$0xff]
    %v274 = vld [vmem:[#allocation5 + $0x6d0] sm:$0xff]
    %v275 = vld [vmem:[#allocation5 + $0x6d8] sm:$0xff]
    %v276 = vld [vmem:[#allocation5 + $0x6e0] sm:$0xff]
    %v277 = vld [vmem:[#allocation5 + $0x6e8] sm:$0xff]
    %v278 = vld [vmem:[#allocation5 + $0x6f0] sm:$0xff]
    %v279 = vld [vmem:[#allocation5 + $0x6f8] sm:$0xff]
    %v280 = vld [vmem:[#allocation5 + $0x700] sm:$0xff]
    %v281 = vld [vmem:[#allocation5 + $0x708] sm:$0xff]
    %v282 = vld [vmem:[#allocation5 + $0x710] sm:$0xff]
    %v283 = vld [vmem:[#allocation5 + $0x718] sm:$0xff]
    %v284 = vld [vmem:[#allocation5 + $0x720] sm:$0xff]
    %v285 = vld [vmem:[#allocation5 + $0x728] sm:$0xff]
    %v286 = vld [vmem:[#allocation5 + $0x730] sm:$0xff]
    %v287 = vld [vmem:[#allocation5 + $0x738] sm:$0xff]
    %v288 = vld [vmem:[#allocation5 + $0x740] sm:$0xff]
    %v289 = vld [vmem:[#allocation5 + $0x748] sm:$0xff]
    %v290 = vld [vmem:[#allocation5 + $0x750] sm:$0xff]
    %v291 = vld [vmem:[#allocation5 + $0x758] sm:$0xff]
    %v292 = vld [vmem:[#allocation5 + $0x760] sm:$0xff]
    %v293 = vld [vmem:[#allocation5 + $0x768] sm:$0xff]
    %v294 = vld [vmem:[#allocation5 + $0x770] sm:$0xff]
    %v295 = vld [vmem:[#allocation5 + $0x778] sm:$0xff]
    %v296 = vld [vmem:[#allocation5 + $0x780] sm:$0xff]
    %v297 = vld [vmem:[#allocation5 + $0x788] sm:$0xff]
    %v298 = vld [vmem:[#allocation5 + $0x790] sm:$0xff]
    %v299 = vld [vmem:[#allocation5 + $0x798] sm:$0xff]
    %v300 = vld [vmem:[#allocation5 + $0x7a0] sm:$0xff]
    %v301 = vld [vmem:[#allocation5 + $0x7a8] sm:$0xff]
    %v302 = vld [vmem:[#allocation5 + $0x7b0] sm:$0xff]
    %v303 = vld [vmem:[#allocation5 + $0x7b8] sm:$0xff]
    %v304 = vld [vmem:[#allocation5 + $0x7c0] sm:$0xff]
    %v305 = vld [vmem:[#allocation5 + $0x7c8] sm:$0xff]
    %v306 = vld [vmem:[#allocation5 + $0x7d0] sm:$0xff]
    %v307 = vld [vmem:[#allocation5 + $0x7d8] sm:$0xff]
    %v308 = vld [vmem:[#allocation5 + $0x7e0] sm:$0xff]
    %v309 = vld [vmem:[#allocation5 + $0x7e8] sm:$0xff]
    %v310 = vld [vmem:[#allocation5 + $0x7f0] sm:$0xff]
    %v311 = vld [vmem:[#allocation5 + $0x7f8] sm:$0xff]
    %312 = vmatprep.subr.mxu0 %v117
    %313 = vmatpush1.msra.mxu0 %v116
    %314 = vmatprep.subr.mxu0 %v113
    %315 = vmatpush1.msra.mxu0 %v112
    %316 = vmatprep.subr.mxu0 %v109
    %317 = vmatpush1.msra.mxu0 %v108
    %318 = vmatprep.subr.mxu0 %v105
    %319 = vmatpush1.msra.mxu0 %v104
    %320 = vmatprep.subr.mxu0 %v101
    %321 = vmatpush1.msra.mxu0 %v100
    %322 = vmatprep.subr.mxu0 %v97
    %323 = vmatpush1.msra.mxu0 %v96
    %324 = vmatprep.subr.mxu0 %v93
    %325 = vmatpush1.msra.mxu0 %v92
    %326 = vmatprep.subr.mxu0 %v89
    %327 = vmatpush1.msra.mxu0 %v88
    %328 = vmatprep.subr.mxu0 %v85
    %329 = vmatpush1.msra.mxu0 %v84
    %330 = vmatprep.subr.mxu0 %v81
    %331 = vmatpush1.msra.mxu0 %v80
    %332 = vmatprep.subr.mxu0 %v77
    %333 = vmatpush1.msra.mxu0 %v76
    %334 = vmatprep.subr.mxu0 %v73
    %335 = vmatpush1.msra.mxu0 %v72
    %336 = vmatprep.subr.mxu0 %v69
    %337 = vmatpush1.msra.mxu0 %v68
    %338 = vmatprep.subr.mxu0 %v65
    %339 = vmatpush1.msra.mxu0 %v64
    %340 = vmatprep.subr.mxu0 %v61
    %341 = vmatpush1.msra.mxu0 %v60
    %342 = vmatprep.subr.mxu0 %v57
    %343 = vmatpush1.msra.mxu0 %v56
    %344 = vmatprep.subr.mxu0 %v181
    %345 = vmatpush2.msra.mxu0 %v180
    %346 = vmatprep.subr.mxu0 %v177
    %347 = vmatpush2.msra.mxu0 %v176
    %348 = vmatprep.subr.mxu0 %v173
    %349 = vmatpush2.msra.mxu0 %v172
    %350 = vmatprep.subr.mxu0 %v169
    %351 = vmatpush2.msra.mxu0 %v168
    %352 = vmatprep.subr.mxu0 %v165
    %353 = vmatpush2.msra.mxu0 %v164
    %354 = vmatprep.subr.mxu0 %v161
    %355 = vmatpush2.msra.mxu0 %v160
    %356 = vmatprep.subr.mxu0 %v157
    %357 = vmatpush2.msra.mxu0 %v156
    %358 = vmatprep.subr.mxu0 %v153
    %359 = vmatpush2.msra.mxu0 %v152
    %360 = vmatprep.subr.mxu0 %v149
    %361 = vmatpush2.msra.mxu0 %v148
    %362 = vmatprep.subr.mxu0 %v145
    %363 = vmatpush2.msra.mxu0 %v144
    %364 = vmatprep.subr.mxu0 %v141
    %365 = vmatpush2.msra.mxu0 %v140
    %366 = vmatprep.subr.mxu0 %v137
    %367 = vmatpush2.msra.mxu0 %v136
    %368 = vmatprep.subr.mxu0 %v133
    %369 = vmatpush2.msra.mxu0 %v132
    %370 = vmatprep.subr.mxu0 %v129
    %371 = vmatpush2.msra.mxu0 %v128
    %372 = vmatprep.subr.mxu0 %v125
    %373 = vmatpush2.msra.mxu0 %v124
    %374 = vmatprep.subr.mxu0 %v121
    %375 = vmatpush2.msra.mxu0 %v120
    %376 = vmatprep.mubr.f32.mxu0 %v53
    %377 = vmatmul.mubr.f32.gmra.mxu0 %v52
    %v378 = vpop.f32.mrf.mxu0
    %v379 = vadd.f32 0.0, %v378
    %v380 = vpop.f32.mrf.mxu0
    %v381 = vadd.f32 0.0, %v380
    %382 = vdwg.mxu0
    %383 = vmatprep.subr.mxu0 %v245
    %384 = vmatpush1.msra.mxu0 %v244
    %385 = vmatprep.subr.mxu0 %v241
    %386 = vmatpush1.msra.mxu0 %v240
    %387 = vmatprep.subr.mxu0 %v237
    %388 = vmatpush1.msra.mxu0 %v236
    %389 = vmatprep.subr.mxu0 %v233
    %390 = vmatpush1.msra.mxu0 %v232
    %391 = vmatprep.subr.mxu0 %v229
    %392 = vmatpush1.msra.mxu0 %v228
    %393 = vmatprep.subr.mxu0 %v225
    %394 = vmatpush1.msra.mxu0 %v224
    %395 = vmatprep.subr.mxu0 %v221
    %396 = vmatpush1.msra.mxu0 %v220
    %397 = vmatprep.subr.mxu0 %v217
    %398 = vmatpush1.msra.mxu0 %v216
    %399 = vmatprep.subr.mxu0 %v213
    %400 = vmatpush1.msra.mxu0 %v212
    %401 = vmatprep.subr.mxu0 %v209
    %402 = vmatpush1.msra.mxu0 %v208
    %403 = vmatprep.subr.mxu0 %v205
    %404 = vmatpush1.msra.mxu0 %v204
    %405 = vmatprep.subr.mxu0 %v201
    %406 = vmatpush1.msra.mxu0 %v200
    %407 = vmatprep.subr.mxu0 %v197
    %408 = vmatpush1.msra.mxu0 %v196
    %409 = vmatprep.subr.mxu0 %v193
    %410 = vmatpush1.msra.mxu0 %v192
    %411 = vmatprep.subr.mxu0 %v189
    %412 = vmatpush1.msra.mxu0 %v188
    %413 = vmatprep.subr.mxu0 %v185
    %414 = vmatpush1.msra.mxu0 %v184
    %415 = vmatprep.subr.mxu0 %v309
    %416 = vmatpush2.msra.mxu0 %v308
    %417 = vmatprep.subr.mxu0 %v305
    %418 = vmatpush2.msra.mxu0 %v304
    %419 = vmatprep.subr.mxu0 %v301
    %420 = vmatpush2.msra.mxu0 %v300
    %421 = vmatprep.subr.mxu0 %v297
    %422 = vmatpush2.msra.mxu0 %v296
    %423 = vmatprep.subr.mxu0 %v293
    %424 = vmatpush2.msra.mxu0 %v292
    %425 = vmatprep.subr.mxu0 %v289
    %426 = vmatpush2.msra.mxu0 %v288
    %427 = vmatprep.subr.mxu0 %v285
    %428 = vmatpush2.msra.mxu0 %v284
    %429 = vmatprep.subr.mxu0 %v281
    %430 = vmatpush2.msra.mxu0 %v280
    %431 = vmatprep.subr.mxu0 %v277
    %432 = vmatpush2.msra.mxu0 %v276
    %433 = vmatprep.subr.mxu0 %v273
    %434 = vmatpush2.msra.mxu0 %v272
    %435 = vmatprep.subr.mxu0 %v269
    %436 = vmatpush2.msra.mxu0 %v268
    %437 = vmatprep.subr.mxu0 %v265
    %438 = vmatpush2.msra.mxu0 %v264
    %439 = vmatprep.subr.mxu0 %v261
    %440 = vmatpush2.msra.mxu0 %v260
    %441 = vmatprep.subr.mxu0 %v257
    %442 = vmatpush2.msra.mxu0 %v256
    %443 = vmatprep.subr.mxu0 %v253
    %444 = vmatpush2.msra.mxu0 %v252
    %445 = vmatprep.subr.mxu0 %v249
    %446 = vmatpush2.msra.mxu0 %v248
    %447 = vmatprep.mubr.f32.mxu0 %v55
    %448 = vmatmul.mubr.f32.gmra.mxu0 %v54
    %v449 = vpop.f32.mrf.mxu0
    %v450 = vadd.f32 %v379, %v449
    %v451 = vpop.f32.mrf.mxu0
    %v452 = vadd.f32 %v381, %v451
    %453 = vdwg.mxu0
    %454 = vmatprep.subr.mxu0 %v119
    %455 = vmatpush1.msra.mxu0 %v118
    %456 = vmatprep.subr.mxu0 %v115
    %457 = vmatpush1.msra.mxu0 %v114
    %458 = vmatprep.subr.mxu0 %v111
    %459 = vmatpush1.msra.mxu0 %v110
    %460 = vmatprep.subr.mxu0 %v107
    %461 = vmatpush1.msra.mxu0 %v106
    %462 = vmatprep.subr.mxu0 %v103
    %463 = vmatpush1.msra.mxu0 %v102
    %464 = vmatprep.subr.mxu0 %v99
    %465 = vmatpush1.msra.mxu0 %v98
    %466 = vmatprep.subr.mxu0 %v95
    %467 = vmatpush1.msra.mxu0 %v94
    %468 = vmatprep.subr.mxu0 %v91
    %469 = vmatpush1.msra.mxu0 %v90
    %470 = vmatprep.subr.mxu0 %v87
    %471 = vmatpush1.msra.mxu0 %v86
    %472 = vmatprep.subr.mxu0 %v83
    %473 = vmatpush1.msra.mxu0 %v82
    %474 = vmatprep.subr.mxu0 %v79
    %475 = vmatpush1.msra.mxu0 %v78
    %476 = vmatprep.subr.mxu0 %v75
    %477 = vmatpush1.msra.mxu0 %v74
    %478 = vmatprep.subr.mxu0 %v71
    %479 = vmatpush1.msra.mxu0 %v70
    %480 = vmatprep.subr.mxu0 %v67
    %481 = vmatpush1.msra.mxu0 %v66
    %482 = vmatprep.subr.mxu0 %v63
    %483 = vmatpush1.msra.mxu0 %v62
    %484 = vmatprep.subr.mxu0 %v59
    %485 = vmatpush1.msra.mxu0 %v58
    %486 = vmatprep.subr.mxu0 %v183
    %487 = vmatpush2.msra.mxu0 %v182
    %488 = vmatprep.subr.mxu0 %v179
    %489 = vmatpush2.msra.mxu0 %v178
    %490 = vmatprep.subr.mxu0 %v175
    %491 = vmatpush2.msra.mxu0 %v174
    %492 = vmatprep.subr.mxu0 %v171
    %493 = vmatpush2.msra.mxu0 %v170
    %494 = vmatprep.subr.mxu0 %v167
    %495 = vmatpush2.msra.mxu0 %v166
    %496 = vmatprep.subr.mxu0 %v163
    %497 = vmatpush2.msra.mxu0 %v162
    %498 = vmatprep.subr.mxu0 %v159
    %499 = vmatpush2.msra.mxu0 %v158
    %500 = vmatprep.subr.mxu0 %v155
    %501 = vmatpush2.msra.mxu0 %v154
    %502 = vmatprep.subr.mxu0 %v151
    %503 = vmatpush2.msra.mxu0 %v150
    %504 = vmatprep.subr.mxu0 %v147
    %505 = vmatpush2.msra.mxu0 %v146
    %506 = vmatprep.subr.mxu0 %v143
    %507 = vmatpush2.msra.mxu0 %v142
    %508 = vmatprep.subr.mxu0 %v139
    %509 = vmatpush2.msra.mxu0 %v138
    %510 = vmatprep.subr.mxu0 %v135
    %511 = vmatpush2.msra.mxu0 %v134
    %512 = vmatprep.subr.mxu0 %v131
    %513 = vmatpush2.msra.mxu0 %v130
    %514 = vmatprep.subr.mxu0 %v127
    %515 = vmatpush2.msra.mxu0 %v126
    %516 = vmatprep.subr.mxu0 %v123
    %517 = vmatpush2.msra.mxu0 %v122
    %518 = vmatprep.mubr.f32.mxu0 %v53
    %519 = vmatmul.mubr.f32.gmra.mxu0 %v52
    %v520 = vpop.f32.mrf.mxu0
    %v521 = vadd.f32 0.0, %v520
    %v522 = vpop.f32.mrf.mxu0
    %v523 = vadd.f32 0.0, %v522
    %524 = vdwg.mxu0
    %525 = vmatprep.subr.mxu0 %v247
    %526 = vmatpush1.msra.mxu0 %v246
    %527 = vmatprep.subr.mxu0 %v243
    %528 = vmatpush1.msra.mxu0 %v242
    %529 = vmatprep.subr.mxu0 %v239
    %530 = vmatpush1.msra.mxu0 %v238
    %531 = vmatprep.subr.mxu0 %v235
    %532 = vmatpush1.msra.mxu0 %v234
    %533 = vmatprep.subr.mxu0 %v231
    %534 = vmatpush1.msra.mxu0 %v230
    %535 = vmatprep.subr.mxu0 %v227
    %536 = vmatpush1.msra.mxu0 %v226
    %537 = vmatprep.subr.mxu0 %v223
    %538 = vmatpush1.msra.mxu0 %v222
    %539 = vmatprep.subr.mxu0 %v219
    %540 = vmatpush1.msra.mxu0 %v218
    %541 = vmatprep.subr.mxu0 %v215
    %542 = vmatpush1.msra.mxu0 %v214
    %543 = vmatprep.subr.mxu0 %v211
    %544 = vmatpush1.msra.mxu0 %v210
    %545 = vmatprep.subr.mxu0 %v207
    %546 = vmatpush1.msra.mxu0 %v206
    %547 = vmatprep.subr.mxu0 %v203
    %548 = vmatpush1.msra.mxu0 %v202
    %549 = vmatprep.subr.mxu0 %v199
    %550 = vmatpush1.msra.mxu0 %v198
    %551 = vmatprep.subr.mxu0 %v195
    %552 = vmatpush1.msra.mxu0 %v194
    %553 = vmatprep.subr.mxu0 %v191
    %554 = vmatpush1.msra.mxu0 %v190
    %555 = vmatprep.subr.mxu0 %v187
    %556 = vmatpush1.msra.mxu0 %v186
    %557 = vmatprep.subr.mxu0 %v311
    %558 = vmatpush2.msra.mxu0 %v310
    %559 = vmatprep.subr.mxu0 %v307
    %560 = vmatpush2.msra.mxu0 %v306
    %561 = vmatprep.subr.mxu0 %v303
    %562 = vmatpush2.msra.mxu0 %v302
    %563 = vmatprep.subr.mxu0 %v299
    %564 = vmatpush2.msra.mxu0 %v298
    %565 = vmatprep.subr.mxu0 %v295
    %566 = vmatpush2.msra.mxu0 %v294
    %567 = vmatprep.subr.mxu0 %v291
    %568 = vmatpush2.msra.mxu0 %v290
    %569 = vmatprep.subr.mxu0 %v287
    %570 = vmatpush2.msra.mxu0 %v286
    %571 = vmatprep.subr.mxu0 %v283
    %572 = vmatpush2.msra.mxu0 %v282
    %573 = vmatprep.subr.mxu0 %v279
    %574 = vmatpush2.msra.mxu0 %v278
    %575 = vmatprep.subr.mxu0 %v275
    %576 = vmatpush2.msra.mxu0 %v274
    %577 = vmatprep.subr.mxu0 %v271
    %578 = vmatpush2.msra.mxu0 %v270
    %579 = vmatprep.subr.mxu0 %v267
    %580 = vmatpush2.msra.mxu0 %v266
    %581 = vmatprep.subr.mxu0 %v263
    %582 = vmatpush2.msra.mxu0 %v262
    %583 = vmatprep.subr.mxu0 %v259
    %584 = vmatpush2.msra.mxu0 %v258
    %585 = vmatprep.subr.mxu0 %v255
    %586 = vmatpush2.msra.mxu0 %v254
    %587 = vmatprep.subr.mxu0 %v251
    %588 = vmatpush2.msra.mxu0 %v250
    %589 = vmatprep.mubr.f32.mxu0 %v55
    %590 = vmatmul.mubr.f32.gmra.mxu0 %v54
    %v591 = vpop.f32.mrf.mxu0
    %v592 = vadd.f32 %v521, %v591
    %v593 = vpop.f32.mrf.mxu0
    %v594 = vadd.f32 %v523, %v593
    %595 = vdwg.mxu0
    %596 = vst [vmem:[#allocation7] sm:$0xff] %v450
    %597 = vst [vmem:[#allocation7 + $0x8] sm:$0xff] %v452
    %598 = vst [vmem:[#allocation7 + $0x10] sm:$0xff] %v592
    %599 = vst [vmem:[#allocation7 + $0x18] sm:$0xff] %v594
    // Predicated region
    $region18: #{tpu_custom_call.1} parent=1 // pred_check
      _
    $region19: #{tpu_custom_call.1} parent=1 // pred_check_branch
      %601 = sbr.rel (0) target = $region21
    $region20: #{tpu_custom_call.1} parent=1 // pred_region
      %s603 = ssub.s32 512, 512
      %604 = vsyncadd [#allocation4], %s603
      %s606 = sshll.u32 [#allocation7], 4
      %s607 = int_to_ptr.vmem [resolvable:$true] %s606
      %609 = dma.vmem_to_hbm [thread:$0]  %s607, 512, %s2, [#allocation4]
    $region21: #{tpu_custom_call.1} parent=1 // pred_fallthru
      _
    // Predicated region
    $region22: #{tpu_custom_call.1} parent=1 // pred_check
      _
    $region23: #{tpu_custom_call.1} parent=1 // pred_check_branch
      %611 = sbr.rel (0) target = $region25
    $region24: #{tpu_custom_call.1} parent=1 // pred_region
      %612 = dma.done [#allocation4], 512
    $region25: #{tpu_custom_call.1} parent=1 // pred_fallthru
      _
    %613 = vsyncpa [#allocation3], 1
    %614 = vsyncpa [#allocation6], 1
    %615 = vsyncpa [#allocation4], 1

</llo_original>
